<compile_context>
chip_gen: v5e
topology: v5e:2x2
jax: 0.10.0
libtpu: 0.0.40
codegen_flags: <defaults>
</compile_context>

<pallas_src>
import math

import jax
import jax.numpy as jnp
from jax.experimental import pallas as pl
from jax.experimental.pallas import tpu as pltpu

_LANE = 128
_BM_GRANULE = 16  # multiple of both the f32 (8) and bf16 (16) sublane tilings


def _round_up(x, m):
    return ((x + m - 1) // m) * m


def _num_tensorcores():
    """TensorCores per chip visible to one jax device (best-effort)."""
    try:
        kind = jax.devices()[0].device_kind.lower()
    except Exception:
        return 1
    if "lite" in kind or "v5e" in kind or "v6" in kind:
        return 1  # single TensorCore
    if "v4" in kind or "v5p" in kind or "v7" in kind or "v5" in kind:
        return 2  # megacore / dual-TC chips
    return 1


def _mlp_kernel(x_ref,
                w1_ref, b1_ref,
                w2_ref, b2_ref,
                w3_ref, b3_ref,
                w4_ref, b4_ref,
                o_ref):
    """Fused 4-layer MLP (Linear+ReLU x3, Linear) on one batch tile.

    x arrives unpadded/f32 and is cast to the weight compute dtype in-register
    (no extra HBM pass).  Hidden/output feature dims are pre-padded to lane
    multiples so every matmul is lane-dense and the output store is an
    unmasked vst.  Accumulation is always f32 (preferred_element_type);
    biases are f32.
    """
    cdt = w1_ref.dtype  # compute dtype for MXU operands (bf16)

    x = x_ref[...].astype(cdt)

    h = jnp.dot(x, w1_ref[...], preferred_element_type=jnp.float32)
    h = jnp.maximum(h + b1_ref[...], 0.0).astype(cdt)

    h = jnp.dot(h, w2_ref[...], preferred_element_type=jnp.float32)
    h = jnp.maximum(h + b2_ref[...], 0.0).astype(cdt)

    h = jnp.dot(h, w3_ref[...], preferred_element_type=jnp.float32)
    h = jnp.maximum(h + b3_ref[...], 0.0).astype(cdt)

    out = jnp.dot(h, w4_ref[...], preferred_element_type=jnp.float32) + b4_ref[...]
    o_ref[...] = out.astype(o_ref.dtype)


def init_params(key, n_input, n_latent=30):
    """Synthetic parameters with the encoder's logical shapes.

    PyTorch nn.Linear stores W as (out, in); we build (out, in) then transpose
    to (in, out) for the x @ W convention used in the kernel.
    """
    dims = [n_input, 256, 128, 96, n_latent]
    params = {}
    for li in range(4):
        fan_in, fan_out = dims[li], dims[li + 1]
        key, kw, kb = jax.random.split(key, 3)
        bound = 1.0 / jnp.sqrt(fan_in)
        w_torch = jax.random.uniform(kw, (fan_out, fan_in),
                                     minval=-bound, maxval=bound,
                                     dtype=jnp.float32)
        b = jax.random.uniform(kb, (1, fan_out),
                               minval=-bound, maxval=bound,
                               dtype=jnp.float32)
        params[f"w{li + 1}"] = w_torch.T          # (in, out)
        params[f"b{li + 1}"] = b                  # (1, out)
    return params


def prepare_params(params, *, compute_dtype=jnp.bfloat16):
    """Zero-pads hidden/output feature dims to lane multiples and casts weights.

    The layer-1 *input* dim is left unpadded (x is passed unpadded).  Padding
    is exact: zero weight rows/cols contribute nothing and relu(0) = 0.
    Biases stay f32 (added to the f32 accumulator).  Do this once, outside
    the forward call.
    """
    prepped = {}
    in_pad = params["w1"].shape[0]  # first-layer input dim stays as-is
    for li in range(1, 5):
        w = params[f"w{li}"]
        b = params[f"b{li}"]
        in_dim, out_dim = w.shape
        out_pad = _round_up(out_dim, _LANE)
        prepped[f"w{li}"] = jnp.pad(
            w, ((0, in_pad - in_dim), (0, out_pad - out_dim))
        ).astype(compute_dtype)
        prepped[f"b{li}"] = jnp.pad(
            b, ((0, 0), (0, out_pad - b.shape[1]))
        ).astype(jnp.float32)
        in_pad = out_pad  # next layer's (padded) input dim
    return prepped


def _choose_tiling(B, block_b, num_cores):
    """Pick (bm, B_pad): few large tiles, minimal trailing-tile padding.

    Single-TC chips get the fewest/largest tiles.  Multi-TC chips get a step
    count that is a multiple of num_cores so the 'parallel' batch axis shards
    evenly across TensorCores (only when B is big enough to be worth it).
    """
    block_b = max(_BM_GRANULE, _round_up(block_b, _BM_GRANULE))
    n_steps = max(1, math.ceil(B / block_b))
    want_split = num_cores > 1 and B >= 2 * _BM_GRANULE
    if want_split:
        n_steps = math.ceil(n_steps / num_cores) * num_cores
    # Derive bm from B so B_pad - B stays < _BM_GRANULE rows per step.
    bm = _round_up(math.ceil(B / n_steps), _BM_GRANULE)
    n_steps = math.ceil(B / bm)
    if want_split and n_steps % num_cores:
        n_steps = math.ceil(n_steps / num_cores) * num_cores
    return bm, n_steps * bm


def met2lwf_forward(x, prepped, n_latent, *, block_b=2048, num_cores=None):
    """Runs the Met2LwF encoder forward pass with a Pallas TPU kernel.

    x: (B, nInput) float array (unpadded; cast to bf16 inside the kernel)
    prepped: output of prepare_params (lane-padded, compute-dtype weights)
    returns: (B, n_latent) float32
    """
    B, n_in = x.shape
    assert prepped["w1"].shape[0] == n_in, (prepped["w1"].shape, n_in)
    d1 = prepped["w1"].shape[1]
    d2 = prepped["w2"].shape[1]
    d3 = prepped["w3"].shape[1]
    d4 = prepped["w4"].shape[1]  # lane-padded latent width (128)

    if num_cores is None:
        num_cores = _num_tensorcores()
    bm, B_pad = _choose_tiling(B, block_b, num_cores)

    if B_pad > B:
        # Only the batch dim is padded (feature dim stays at nInput).
        x = jnp.pad(x, ((0, B_pad - B), (0, 0)))

    def full_spec(shape):
        # Whole (small) parameter resident in VMEM; constant block index so it
        # is fetched once and not re-DMA'd across grid steps.
        return pl.BlockSpec(shape, lambda i: (0, 0))

    out = pl.pallas_call(
        _mlp_kernel,
        # bf16 @ 128 lanes: unmasked lane-dense store, half the write bytes
        # of f32; real (B, n_latent) slice is taken in the epilogue below.
        out_shape=jax.ShapeDtypeStruct((B_pad, d4), jnp.bfloat16),
        grid_spec=pltpu.PrefetchScalarGridSpec(
            num_scalar_prefetch=0,
            grid=(B_pad // bm,),
            in_specs=[
                # x tile: last dim == full array dim (nInput), so no 128-pad
                # is required; rows are bm (multiple of 16).
                pl.BlockSpec((bm, n_in), lambda i: (i, 0)),
                full_spec((n_in, d1)), full_spec((1, d1)),   # layer 1
                full_spec((d1, d2)), full_spec((1, d2)),     # layer 2
                full_spec((d2, d3)), full_spec((1, d3)),     # layer 3
                full_spec((d3, d4)), full_spec((1, d4)),     # layer 4
            ],
            out_specs=pl.BlockSpec((bm, d4), lambda i: (i, 0)),
        ),
        compiler_params=pltpu.CompilerParams(
            dimension_semantics=("parallel",),
            vmem_limit_bytes=32 * 1024 * 1024,
        ),
    )(x,
      prepped["w1"], prepped["b1"],
      prepped["w2"], prepped["b2"],
      prepped["w3"], prepped["b3"],
      prepped["w4"], prepped["b4"])

    return out[:B, :n_latent].astype(jnp.float32)


def _reference_prepared(x, prepped, n_latent):
    """Pure-JAX reference with the same padded/cast operands as the kernel."""
    cdt = prepped["w1"].dtype
    h = x.astype(cdt)
    for li in range(1, 4):
        h = jnp.dot(h, prepped[f"w{li}"],
                    preferred_element_type=jnp.float32) + prepped[f"b{li}"]
        h = jnp.maximum(h, 0.0).astype(cdt)
    out = jnp.dot(h, prepped["w4"],
                  preferred_element_type=jnp.float32) + prepped["b4"]
    return out[:, :n_latent]


def _reference_f32(x, params):
    h = x
    for li in range(1, 4):
        h = jnp.maximum(h @ params[f"w{li}"] + params[f"b{li}"], 0.0)
    return h @ params["w4"] + params["b4"]


# TODO(synk): training-time pieces of the module (TripletMarginLoss/miner,
# K_Means labeler, LwFloss, fit loop) are not part of forward() and are not
# implemented here.

if __name__ == "__main__":
    key = jax.random.PRNGKey(0)
    B, N_INPUT, N_LATENT = 8, 32, 30

    key, kx = jax.random.split(key)
    x = jax.random.normal(kx, (B, N_INPUT), dtype=jnp.float32)
    params = init_params(key, N_INPUT, N_LATENT)

    # bf16 operands + f32 accumulation (MXU-native), bf16 output.
    prepped = prepare_params(params, compute_dtype=jnp.bfloat16)

    out = met2lwf_forward(x, prepped, N_LATENT)
    out = jax.block_until_ready(out)
    assert out.shape == (B, N_LATENT), out.shape

    # Check against a reference that uses the same bf16 operands, quantized to
    # bf16 like the kernel's output store.
    ref_bf16 = _reference_prepared(x, prepped, N_LATENT)
    ref_q = ref_bf16.astype(jnp.bfloat16).astype(jnp.float32)
    assert jnp.allclose(out, ref_q, atol=3e-2, rtol=3e-2), (
        float(jnp.max(jnp.abs(out - ref_q))))

    # Loose sanity check against the full-precision f32 reference.
    ref_f32 = _reference_f32(x, params)
    assert jnp.allclose(out, ref_f32, atol=1e-1, rtol=1e-1), (
        float(jnp.max(jnp.abs(out - ref_f32))))

    print("KERNEL_OK")
</pallas_src>

<mosaic_0001>
module attributes {stable_mosaic.version = 11 : i64} {
  func.func @_mlp_kernel(%arg0: i32, %arg1: memref<16x32xf32, #tpu.memory_space<vmem>>, %arg2: memref<32x256xbf16, #tpu.memory_space<vmem>>, %arg3: memref<1x256xf32, #tpu.memory_space<vmem>>, %arg4: memref<256x128xbf16, #tpu.memory_space<vmem>>, %arg5: memref<1x128xf32, #tpu.memory_space<vmem>>, %arg6: memref<128x128xbf16, #tpu.memory_space<vmem>>, %arg7: memref<1x128xf32, #tpu.memory_space<vmem>>, %arg8: memref<128x128xbf16, #tpu.memory_space<vmem>>, %arg9: memref<1x128xf32, #tpu.memory_space<vmem>>, %arg10: memref<16x128xbf16, #tpu.memory_space<vmem>>) attributes {dimension_semantics = [#tpu.dimension_semantics<parallel>], iteration_bounds = array<i64: 1>, scalar_prefetch = 0 : i64, scratch_operands = 0 : i64, tpu.core_type = #tpu.core_type<tc>, window_params = [{transform_indices = @transform_0, window_bounds = array<i64: 16, 32>}, {pipeline_mode = #tpu.pipeline_mode<synchronous>, transform_indices = @transform_1, window_bounds = array<i64: 32, 256>}, {pipeline_mode = #tpu.pipeline_mode<synchronous>, transform_indices = @transform_2, window_bounds = array<i64: 1, 256>}, {pipeline_mode = #tpu.pipeline_mode<synchronous>, transform_indices = @transform_3, window_bounds = array<i64: 256, 128>}, {pipeline_mode = #tpu.pipeline_mode<synchronous>, transform_indices = @transform_4, window_bounds = array<i64: 1, 128>}, {pipeline_mode = #tpu.pipeline_mode<synchronous>, transform_indices = @transform_5, window_bounds = array<i64: 128, 128>}, {pipeline_mode = #tpu.pipeline_mode<synchronous>, transform_indices = @transform_6, window_bounds = array<i64: 1, 128>}, {pipeline_mode = #tpu.pipeline_mode<synchronous>, transform_indices = @transform_7, window_bounds = array<i64: 128, 128>}, {pipeline_mode = #tpu.pipeline_mode<synchronous>, transform_indices = @transform_8, window_bounds = array<i64: 1, 128>}, {transform_indices = @transform_9, window_bounds = array<i64: 16, 128>}]} {
    %c0 = arith.constant 0 : index
    %c0_0 = arith.constant 0 : index
    %0 = vector.load %arg1[%c0, %c0_0] : memref<16x32xf32, #tpu.memory_space<vmem>>, vector<16x32xf32>
    %1 = arith.truncf %0 : vector<16x32xf32> to vector<16x32xbf16>
    %c0_1 = arith.constant 0 : index
    %c0_2 = arith.constant 0 : index
    %2 = vector.load %arg2[%c0_1, %c0_2] : memref<32x256xbf16, #tpu.memory_space<vmem>>, vector<32x256xbf16>
    %cst = arith.constant dense<0.000000e+00> : vector<16x256xf32>
    %3 = tpu.matmul %1, %2, %cst {dimension_numbers = #tpu.dot_dimension_numbers<[1], [0], [0], [1], [0, 0, 1, 1], [], []>} : vector<16x32xbf16>, vector<32x256xbf16>, vector<16x256xf32> -> vector<16x256xf32>
    %c0_3 = arith.constant 0 : index
    %c0_4 = arith.constant 0 : index
    %4 = vector.load %arg3[%c0_3, %c0_4] : memref<1x256xf32, #tpu.memory_space<vmem>>, vector<1x256xf32>
    %5 = vector.broadcast %4 : vector<1x256xf32> to vector<16x256xf32>
    %6 = arith.addf %3, %5 : vector<16x256xf32>
    %cst_5 = arith.constant 0.000000e+00 : f32
    %7 = vector.broadcast %cst_5 : f32 to vector<16x256xf32>
    %8 = arith.maximumf %6, %7 : vector<16x256xf32>
    %9 = arith.truncf %8 : vector<16x256xf32> to vector<16x256xbf16>
    %c0_6 = arith.constant 0 : index
    %c0_7 = arith.constant 0 : index
    %10 = vector.load %arg4[%c0_6, %c0_7] : memref<256x128xbf16, #tpu.memory_space<vmem>>, vector<256x128xbf16>
    %cst_8 = arith.constant dense<0.000000e+00> : vector<16x128xf32>
    %11 = tpu.matmul %9, %10, %cst_8 {dimension_numbers = #tpu.dot_dimension_numbers<[1], [0], [0], [1], [0, 0, 1, 1], [], []>} : vector<16x256xbf16>, vector<256x128xbf16>, vector<16x128xf32> -> vector<16x128xf32>
    %c0_9 = arith.constant 0 : index
    %c0_10 = arith.constant 0 : index
    %12 = vector.load %arg5[%c0_9, %c0_10] : memref<1x128xf32, #tpu.memory_space<vmem>>, vector<1x128xf32>
    %13 = vector.broadcast %12 : vector<1x128xf32> to vector<16x128xf32>
    %14 = arith.addf %11, %13 : vector<16x128xf32>
    %cst_11 = arith.constant 0.000000e+00 : f32
    %15 = vector.broadcast %cst_11 : f32 to vector<16x128xf32>
    %16 = arith.maximumf %14, %15 : vector<16x128xf32>
    %17 = arith.truncf %16 : vector<16x128xf32> to vector<16x128xbf16>
    %c0_12 = arith.constant 0 : index
    %c0_13 = arith.constant 0 : index
    %18 = vector.load %arg6[%c0_12, %c0_13] : memref<128x128xbf16, #tpu.memory_space<vmem>>, vector<128x128xbf16>
    %cst_14 = arith.constant dense<0.000000e+00> : vector<16x128xf32>
    %19 = tpu.matmul %17, %18, %cst_14 {dimension_numbers = #tpu.dot_dimension_numbers<[1], [0], [0], [1], [0, 0, 1, 1], [], []>} : vector<16x128xbf16>, vector<128x128xbf16>, vector<16x128xf32> -> vector<16x128xf32>
    %c0_15 = arith.constant 0 : index
    %c0_16 = arith.constant 0 : index
    %20 = vector.load %arg7[%c0_15, %c0_16] : memref<1x128xf32, #tpu.memory_space<vmem>>, vector<1x128xf32>
    %21 = vector.broadcast %20 : vector<1x128xf32> to vector<16x128xf32>
    %22 = arith.addf %19, %21 : vector<16x128xf32>
    %cst_17 = arith.constant 0.000000e+00 : f32
    %23 = vector.broadcast %cst_17 : f32 to vector<16x128xf32>
    %24 = arith.maximumf %22, %23 : vector<16x128xf32>
    %25 = arith.truncf %24 : vector<16x128xf32> to vector<16x128xbf16>
    %c0_18 = arith.constant 0 : index
    %c0_19 = arith.constant 0 : index
    %26 = vector.load %arg8[%c0_18, %c0_19] : memref<128x128xbf16, #tpu.memory_space<vmem>>, vector<128x128xbf16>
    %cst_20 = arith.constant dense<0.000000e+00> : vector<16x128xf32>
    %27 = tpu.matmul %25, %26, %cst_20 {dimension_numbers = #tpu.dot_dimension_numbers<[1], [0], [0], [1], [0, 0, 1, 1], [], []>} : vector<16x128xbf16>, vector<128x128xbf16>, vector<16x128xf32> -> vector<16x128xf32>
    %c0_21 = arith.constant 0 : index
    %c0_22 = arith.constant 0 : index
    %28 = vector.load %arg9[%c0_21, %c0_22] : memref<1x128xf32, #tpu.memory_space<vmem>>, vector<1x128xf32>
    %29 = vector.broadcast %28 : vector<1x128xf32> to vector<16x128xf32>
    %30 = arith.addf %27, %29 : vector<16x128xf32>
    %31 = arith.truncf %30 : vector<16x128xf32> to vector<16x128xbf16>
    %c0_23 = arith.constant 0 : index
    %c0_24 = arith.constant 0 : index
    %32 = vector.load %arg10[%c0_23, %c0_24] : memref<16x128xbf16, #tpu.memory_space<vmem>>, vector<16x128xbf16>
    tpu.vector_store %arg10[%c0_23, %c0_24], %31 {strides = array<i32>} : memref<16x128xbf16, #tpu.memory_space<vmem>>, vector<16x128xbf16>,
    return
  }
  func.func @transform_0(%arg0: i32) -> (i32, i32) {
    %c0_i32 = arith.constant 0 : i32
    %c0_i32_0 = arith.constant 0 : i32
    return %arg0, %c0_i32 : i32, i32
  }
  func.func @transform_1(%arg0: i32) -> (i32, i32) {
    %c0_i32 = arith.constant 0 : i32
    %c0_i32_0 = arith.constant 0 : i32
    %c0_i32_1 = arith.constant 0 : i32
    return %c0_i32, %c0_i32_0 : i32, i32
  }
  func.func @transform_2(%arg0: i32) -> (i32, i32) {
    %c0_i32 = arith.constant 0 : i32
    %c0_i32_0 = arith.constant 0 : i32
    %c0_i32_1 = arith.constant 0 : i32
    return %c0_i32, %c0_i32_0 : i32, i32
  }
  func.func @transform_3(%arg0: i32) -> (i32, i32) {
    %c0_i32 = arith.constant 0 : i32
    %c0_i32_0 = arith.constant 0 : i32
    %c0_i32_1 = arith.constant 0 : i32
    return %c0_i32, %c0_i32_0 : i32, i32
  }
  func.func @transform_4(%arg0: i32) -> (i32, i32) {
    %c0_i32 = arith.constant 0 : i32
    %c0_i32_0 = arith.constant 0 : i32
    %c0_i32_1 = arith.constant 0 : i32
    return %c0_i32, %c0_i32_0 : i32, i32
  }
  func.func @transform_5(%arg0: i32) -> (i32, i32) {
    %c0_i32 = arith.constant 0 : i32
    %c0_i32_0 = arith.constant 0 : i32
    %c0_i32_1 = arith.constant 0 : i32
    return %c0_i32, %c0_i32_0 : i32, i32
  }
  func.func @transform_6(%arg0: i32) -> (i32, i32) {
    %c0_i32 = arith.constant 0 : i32
    %c0_i32_0 = arith.constant 0 : i32
    %c0_i32_1 = arith.constant 0 : i32
    return %c0_i32, %c0_i32_0 : i32, i32
  }
  func.func @transform_7(%arg0: i32) -> (i32, i32) {
    %c0_i32 = arith.constant 0 : i32
    %c0_i32_0 = arith.constant 0 : i32
    %c0_i32_1 = arith.constant 0 : i32
    return %c0_i32, %c0_i32_0 : i32, i32
  }
  func.func @transform_8(%arg0: i32) -> (i32, i32) {
    %c0_i32 = arith.constant 0 : i32
    %c0_i32_0 = arith.constant 0 : i32
    %c0_i32_1 = arith.constant 0 : i32
    return %c0_i32, %c0_i32_0 : i32, i32
  }
  func.func @transform_9(%arg0: i32) -> (i32, i32) {
    %c0_i32 = arith.constant 0 : i32
    %c0_i32_0 = arith.constant 0 : i32
    return %arg0, %c0_i32 : i32, i32
  }
}

</mosaic_0001>

<llo_original>
// kernel: tpu_custom_call.1
$region0: #{tpu_custom_call.1}
  #allocation0 [shape = 'u32[]', space=smem, size = 0x4, offset = 0x4, fixed_abs, tag = 'smem constant byte address 0x4 - core index']
  #allocation1 [shape = 'u32[72,128]{1,0:T(1,128)}', space=vmem, size = 0x9000, scoped, tag = 'internal scratch']
  %s0 = inlined_call_operand.hbm [shape: f32[16,32], index: 0, kind: input, shape index: {}]
  %s1 = inlined_call_operand.hbm [shape: bf16[32,256], index: 1, kind: input, shape index: {}]
  %s2 = inlined_call_operand.hbm [shape: f32[1,256], index: 2, kind: input, shape index: {}]
  %s3 = inlined_call_operand.hbm [shape: bf16[256,128], index: 3, kind: input, shape index: {}]
  %s4 = inlined_call_operand.vmem [shape: f32[1,128], index: 4, kind: input, shape index: {}]
  %s5 = inlined_call_operand.hbm [shape: bf16[128,128], index: 5, kind: input, shape index: {}]
  %s6 = inlined_call_operand.vmem [shape: f32[1,128], index: 6, kind: input, shape index: {}]
  %s7 = inlined_call_operand.hbm [shape: bf16[128,128], index: 7, kind: input, shape index: {}]
  %s8 = inlined_call_operand.vmem [shape: f32[1,128], index: 8, kind: input, shape index: {}]
  %s9 = inlined_call_operand.hbm [shape: bf16[16,128], index: 9, kind: output, shape index: {}]
  %s10 = sld [smem:[#allocation0]]
  $region70: #{tpu_custom_call.1} parent=0
    _
  %s12 = ssub.s32 1, %s10
  %s13 = scalar_select 0, %s12, %s10
  $region1: #{tpu_custom_call.1} parent=0
    #allocation2 [shape = 'u8[8192]{0}', space=vmem, size = 0x2000, scoped, tag = 'input window, operand 0, single buffered']
    #allocation3 [shape = 's32[1]{0}', space=sflag, size = 0x4, scoped, tag = 'scoped memory for tpu_custom_call.1']
    #allocation4 [shape = 's32[1]{0}', space=sflag, size = 0x4, scoped, tag = 'scoped memory for tpu_custom_call.1']
    #allocation5 [shape = 'u8[16384]{0}', space=vmem, size = 0x4000, scoped, tag = 'input window, operand 1, single buffered']
    #allocation6 [shape = 's32[1]{0}', space=sflag, size = 0x4, scoped, tag = 'scoped memory for tpu_custom_call.1']
    #allocation7 [shape = 'u8[1024]{0}', space=vmem, size = 0x400, scoped, tag = 'input window, operand 2, single buffered']
    #allocation8 [shape = 'u8[65536]{0}', space=vmem, size = 0x10000, scoped, tag = 'input window, operand 3, single buffered']
    #allocation9 [shape = 's32[1]{0}', space=sflag, size = 0x4, scoped, tag = 'scoped memory for tpu_custom_call.1']
    #allocation10 [shape = 'u8[32768]{0}', space=vmem, size = 0x8000, scoped, tag = 'input window, operand 5, single buffered']
    #allocation11 [shape = 'u8[32768]{0}', space=vmem, size = 0x8000, scoped, tag = 'input window, operand 7, single buffered']
    #allocation12 [shape = 's32[1]{0}', space=sflag, size = 0x4, scoped, tag = 'scoped memory for tpu_custom_call.1']
    #allocation13 [shape = 'u8[4096]{0}', space=vmem, size = 0x1000, scoped, tag = 'output window, operand 0, single buffered']
    %14 = vsyncpa [#allocation3], 0
    %15 = vsyncpa [#allocation6], 0
    %16 = vsyncpa [#allocation9], 0
    %17 = vsyncpa [#allocation12], 0
    %18 = vsyncpa [#allocation4], 0
    // Predicated region
    $region2: #{tpu_custom_call.1} parent=1 // pred_check
      _
    $region3: #{tpu_custom_call.1} parent=1 // pred_check_branch
      %20 = sbr.rel (0) target = $region5
    $region4: #{tpu_custom_call.1} parent=1 // pred_region
      %22 = vsyncadd [#allocation3], 0
      %s23 = sshll.u32 %s0, 4
      %s24 = int_to_ptr.hbm [resolvable:$true] %s23
      %s25 = sshll.u32 [#allocation2], 4
      %s26 = int_to_ptr.vmem [resolvable:$true] %s25
      %31 = dma.hbm_to_vmem [thread:$0]  %s24, 256, %s26, [#allocation3], 128, 128, 8
    $region5: #{tpu_custom_call.1} parent=1 // pred_fallthru
      _
    // Predicated region
    $region6: #{tpu_custom_call.1} parent=1 // pred_check
      _
    $region7: #{tpu_custom_call.1} parent=1 // pred_check_branch
      %33 = sbr.rel (0) target = $region9
    $region8: #{tpu_custom_call.1} parent=1 // pred_region
      %35 = vsyncadd [#allocation6], 0
      %s36 = sshll.u32 %s1, 4
      %s37 = int_to_ptr.hbm [resolvable:$true] %s36
      %s38 = sshll.u32 [#allocation5], 4
      %s39 = int_to_ptr.vmem [resolvable:$true] %s38
      %44 = dma.hbm_to_vmem [thread:$0]  %s37, 512, %s39, [#allocation6], 128, 128, 8
    $region9: #{tpu_custom_call.1} parent=1 // pred_fallthru
      _
    // Predicated region
    $region10: #{tpu_custom_call.1} parent=1 // pred_check
      _
    $region11: #{tpu_custom_call.1} parent=1 // pred_check_branch
      %46 = sbr.rel (0) target = $region13
    $region12: #{tpu_custom_call.1} parent=1 // pred_region
      %48 = vsyncadd [#allocation6], 0
      %s50 = sshll.u32 %s2, 4
      %s51 = int_to_ptr.hbm [resolvable:$true] %s50
      %s52 = sshll.u32 [#allocation7], 4
      %s53 = int_to_ptr.vmem [resolvable:$true] %s52
      %55 = dma.hbm_to_vmem [thread:$0]  %s51, 32, %s53, [#allocation6]
    $region13: #{tpu_custom_call.1} parent=1 // pred_fallthru
      _
    // Predicated region
    $region14: #{tpu_custom_call.1} parent=1 // pred_check
      _
    $region15: #{tpu_custom_call.1} parent=1 // pred_check_branch
      %57 = sbr.rel (0) target = $region17
    $region16: #{tpu_custom_call.1} parent=1 // pred_region
      %59 = vsyncadd [#allocation9], 0
      %s60 = sshll.u32 %s3, 4
      %s61 = int_to_ptr.hbm [resolvable:$true] %s60
      %s62 = sshll.u32 [#allocation8], 4
      %s63 = int_to_ptr.vmem [resolvable:$true] %s62
      %68 = dma.hbm_to_vmem [thread:$0]  %s61, 2048, %s63, [#allocation9], 64, 64, 4
    $region17: #{tpu_custom_call.1} parent=1 // pred_fallthru
      _
    // Predicated region
    $region18: #{tpu_custom_call.1} parent=1 // pred_check
      _
    $region19: #{tpu_custom_call.1} parent=1 // pred_check_branch
      %70 = sbr.rel (0) target = $region21
    $region20: #{tpu_custom_call.1} parent=1 // pred_region
      _
    $region21: #{tpu_custom_call.1} parent=1 // pred_fallthru
      _
    // Predicated region
    $region22: #{tpu_custom_call.1} parent=1 // pred_check
      _
    $region23: #{tpu_custom_call.1} parent=1 // pred_check_branch
      %72 = sbr.rel (0) target = $region25
    $region24: #{tpu_custom_call.1} parent=1 // pred_region
      %74 = vsyncadd [#allocation9], 0
      %s75 = sshll.u32 %s5, 4
      %s76 = int_to_ptr.hbm [resolvable:$true] %s75
      %s77 = sshll.u32 [#allocation10], 4
      %s78 = int_to_ptr.vmem [resolvable:$true] %s77
      %83 = dma.hbm_to_vmem [thread:$0]  %s76, 1024, %s78, [#allocation9], 64, 64, 4
    $region25: #{tpu_custom_call.1} parent=1 // pred_fallthru
      _
    // Predicated region
    $region26: #{tpu_custom_call.1} parent=1 // pred_check
      _
    $region27: #{tpu_custom_call.1} parent=1 // pred_check_branch
      %85 = sbr.rel (0) target = $region29
    $region28: #{tpu_custom_call.1} parent=1 // pred_region
      _
    $region29: #{tpu_custom_call.1} parent=1 // pred_fallthru
      _
    // Predicated region
    $region30: #{tpu_custom_call.1} parent=1 // pred_check
      _
    $region31: #{tpu_custom_call.1} parent=1 // pred_check_branch
      %87 = sbr.rel (0) target = $region33
    $region32: #{tpu_custom_call.1} parent=1 // pred_region
      %89 = vsyncadd [#allocation12], 0
      %s90 = sshll.u32 %s7, 4
      %s91 = int_to_ptr.hbm [resolvable:$true] %s90
      %s92 = sshll.u32 [#allocation11], 4
      %s93 = int_to_ptr.vmem [resolvable:$true] %s92
      %98 = dma.hbm_to_vmem [thread:$0]  %s91, 1024, %s93, [#allocation12], 64, 64, 4
    $region33: #{tpu_custom_call.1} parent=1 // pred_fallthru
      _
    // Predicated region
    $region34: #{tpu_custom_call.1} parent=1 // pred_check
      _
    $region35: #{tpu_custom_call.1} parent=1 // pred_check_branch
      %100 = sbr.rel (0) target = $region37
    $region36: #{tpu_custom_call.1} parent=1 // pred_region
      _
    $region37: #{tpu_custom_call.1} parent=1 // pred_fallthru
      _
    // Predicated region
    $region38: #{tpu_custom_call.1} parent=1 // pred_check
      _
    $region39: #{tpu_custom_call.1} parent=1 // pred_check_branch
      %102 = sbr.rel (0) target = $region41
    $region40: #{tpu_custom_call.1} parent=1 // pred_region
      %104 = dma.done [#allocation3], 256
    $region41: #{tpu_custom_call.1} parent=1 // pred_fallthru
      _
    // Predicated region
    $region42: #{tpu_custom_call.1} parent=1 // pred_check
      _
    $region43: #{tpu_custom_call.1} parent=1 // pred_check_branch
      %106 = sbr.rel (0) target = $region45
    $region44: #{tpu_custom_call.1} parent=1 // pred_region
      %108 = dma.done [#allocation6], 512
    $region45: #{tpu_custom_call.1} parent=1 // pred_fallthru
      _
    // Predicated region
    $region46: #{tpu_custom_call.1} parent=1 // pred_check
      _
    $region47: #{tpu_custom_call.1} parent=1 // pred_check_branch
      %110 = sbr.rel (0) target = $region49
    $region48: #{tpu_custom_call.1} parent=1 // pred_region
      %112 = dma.done [#allocation6], 32
    $region49: #{tpu_custom_call.1} parent=1 // pred_fallthru
      _
    // Predicated region
    $region50: #{tpu_custom_call.1} parent=1 // pred_check
      _
    $region51: #{tpu_custom_call.1} parent=1 // pred_check_branch
      %114 = sbr.rel (0) target = $region53
    $region52: #{tpu_custom_call.1} parent=1 // pred_region
      %116 = dma.done [#allocation9], 2048
    $region53: #{tpu_custom_call.1} parent=1 // pred_fallthru
      _
    // Predicated region
    $region54: #{tpu_custom_call.1} parent=1 // pred_check
      _
    $region55: #{tpu_custom_call.1} parent=1 // pred_check_branch
      %118 = sbr.rel (0) target = $region57
    $region56: #{tpu_custom_call.1} parent=1 // pred_region
      %120 = dma.done [#allocation9], 1024
    $region57: #{tpu_custom_call.1} parent=1 // pred_fallthru
      _
    // Predicated region
    $region58: #{tpu_custom_call.1} parent=1 // pred_check
      _
    $region59: #{tpu_custom_call.1} parent=1 // pred_check_branch
      %122 = sbr.rel (0) target = $region61
    $region60: #{tpu_custom_call.1} parent=1 // pred_region
      %124 = dma.done [#allocation12], 1024
    $region61: #{tpu_custom_call.1} parent=1 // pred_fallthru
      _
    %v126 = vld [vmem:[#allocation2] sm:$0xff]
    %v127 = vld [vmem:[#allocation2 + $0x8] sm:$0xff]
    %v128 = vpack.c.bf16 %v127, %v126
    %v129 = vld [vmem:[#allocation5] sm:$0xff]
    %v130 = vld [vmem:[#allocation5 + $0x8] sm:$0xff]
    %v131 = vld [vmem:[#allocation5 + $0x10] sm:$0xff]
    %v132 = vld [vmem:[#allocation5 + $0x18] sm:$0xff]
    %v133 = vld [vmem:[#allocation7] sm:$0x3]
    %v135 = vperm.slane %v133, 0
    %v136 = vperm.slane %v133, 1
    %v143 = vunpack.c.l.b16 %v129
    %v144 = vunpack.c.h.b16 %v129
    %v145 = vunpack.c.l.b16 %v130
    %v146 = vunpack.c.h.b16 %v130
    %v147 = vunpack.c.l.b16 %v131
    %v148 = vunpack.c.h.b16 %v131
    %v149 = vunpack.c.l.b16 %v132
    %v150 = vunpack.c.h.b16 %v132
    %v151 = vpack.c.b16 %v145, %v143
    %v152 = vpack.c.b16 %v146, %v144
    %v153 = vpack.c.b16 %v149, %v147
    %v154 = vpack.c.b16 %v150, %v148
    %vm159 = vcmask 261120
    %v161 = vsel %vm159, %v128, 0
    %163 = vmatpush.bf16.msra.mxu0 0
    %164 = vmatpush.bf16.msra.mxu0 0
    %165 = vmatpush.bf16.msra.mxu0 0
    %166 = vmatpush.bf16.msra.mxu0 0
    %167 = vmatpush.bf16.msra.mxu0 0
    %168 = vmatpush.bf16.msra.mxu0 0
    %169 = vmatpush.bf16.msra.mxu0 %v153
    %170 = vmatpush.bf16.msra.mxu0 %v151
    %171 = vmatmul.bf16.gmra.mxu0 %v161
    %v172 = vpop.f32.mrf.mxu0
    %v173 = vadd.f32 %v135, %v172
    %v174 = vpop.f32.mrf.mxu0
    %v175 = vadd.f32 %v135, %v174
    %176 = vdwg.mxu0
    %177 = vmatpush.bf16.msra.mxu0 0
    %178 = vmatpush.bf16.msra.mxu0 0
    %179 = vmatpush.bf16.msra.mxu0 0
    %180 = vmatpush.bf16.msra.mxu0 0
    %181 = vmatpush.bf16.msra.mxu0 0
    %182 = vmatpush.bf16.msra.mxu0 0
    %183 = vmatpush.bf16.msra.mxu0 %v154
    %184 = vmatpush.bf16.msra.mxu0 %v152
    %185 = vmatmul.bf16.gmra.mxu0 %v161
    %v186 = vpop.f32.mrf.mxu0
    %v187 = vadd.f32 %v136, %v186
    %v188 = vpop.f32.mrf.mxu0
    %v189 = vadd.f32 %v136, %v188
    %190 = vdwg.mxu0
    %v191 = vmax.f32 %v173, 0.0
    %v192 = vmax.f32 %v187, 0.0
    %v193 = vmax.f32 %v175, 0.0
    %v194 = vmax.f32 %v189, 0.0
    %v195 = vpack.c.bf16 %v193, %v191
    %v196 = vpack.c.bf16 %v194, %v192
    %v197 = vld [vmem:[#allocation8] sm:$0xf]
    %v198 = vld [vmem:[#allocation8 + $0x4] sm:$0xf]
    %v199 = vld [vmem:[#allocation8 + $0x8] sm:$0xf]
    %v200 = vld [vmem:[#allocation8 + $0xc] sm:$0xf]
    %v201 = vld [vmem:[#allocation8 + $0x10] sm:$0xf]
    %v202 = vld [vmem:[#allocation8 + $0x14] sm:$0xf]
    %v203 = vld [vmem:[#allocation8 + $0x18] sm:$0xf]
    %v204 = vld [vmem:[#allocation8 + $0x1c] sm:$0xf]
    %v205 = vld [vmem:[#allocation8 + $0x20] sm:$0xf]
    %v206 = vld [vmem:[#allocation8 + $0x24] sm:$0xf]
    %v207 = vld [vmem:[#allocation8 + $0x28] sm:$0xf]
    %v208 = vld [vmem:[#allocation8 + $0x2c] sm:$0xf]
    %v209 = vld [vmem:[#allocation8 + $0x30] sm:$0xf]
    %v210 = vld [vmem:[#allocation8 + $0x34] sm:$0xf]
    %v211 = vld [vmem:[#allocation8 + $0x38] sm:$0xf]
    %v212 = vld [vmem:[#allocation8 + $0x3c] sm:$0xf]
    %v213 = vld [vmem:[#allocation8 + $0x40] sm:$0xf]
    %v214 = vld [vmem:[#allocation8 + $0x44] sm:$0xf]
    %v215 = vld [vmem:[#allocation8 + $0x48] sm:$0xf]
    %v216 = vld [vmem:[#allocation8 + $0x4c] sm:$0xf]
    %v217 = vld [vmem:[#allocation8 + $0x50] sm:$0xf]
    %v218 = vld [vmem:[#allocation8 + $0x54] sm:$0xf]
    %v219 = vld [vmem:[#allocation8 + $0x58] sm:$0xf]
    %v220 = vld [vmem:[#allocation8 + $0x5c] sm:$0xf]
    %v221 = vld [vmem:[#allocation8 + $0x60] sm:$0xf]
    %v222 = vld [vmem:[#allocation8 + $0x64] sm:$0xf]
    %v223 = vld [vmem:[#allocation8 + $0x68] sm:$0xf]
    %v224 = vld [vmem:[#allocation8 + $0x6c] sm:$0xf]
    %v225 = vld [vmem:[#allocation8 + $0x70] sm:$0xf]
    %v226 = vld [vmem:[#allocation8 + $0x74] sm:$0xf]
    %v227 = vld [vmem:[#allocation8 + $0x78] sm:$0xf]
    %v228 = vld [vmem:[#allocation8 + $0x7c] sm:$0xf]
    %v229 = vld [vmem:[%s4] sm:$0x1]
    %v231 = vperm.slane %v229, 0
    %v265 = vunpack.c.l.b16 %v197
    %v266 = vunpack.c.l.b16 %v198
    %v267 = vunpack.c.l.b16 %v199
    %v268 = vunpack.c.l.b16 %v200
    %v269 = vunpack.c.l.b16 %v201
    %v270 = vunpack.c.l.b16 %v202
    %v271 = vunpack.c.l.b16 %v203
    %v272 = vunpack.c.l.b16 %v204
    %v273 = vunpack.c.l.b16 %v205
    %v274 = vunpack.c.l.b16 %v206
    %v275 = vunpack.c.l.b16 %v207
    %v276 = vunpack.c.l.b16 %v208
    %v277 = vunpack.c.l.b16 %v209
    %v278 = vunpack.c.l.b16 %v210
    %v279 = vunpack.c.l.b16 %v211
    %v280 = vunpack.c.l.b16 %v212
    %v281 = vunpack.c.l.b16 %v213
    %v282 = vunpack.c.l.b16 %v214
    %v283 = vunpack.c.l.b16 %v215
    %v284 = vunpack.c.l.b16 %v216
    %v285 = vunpack.c.l.b16 %v217
    %v286 = vunpack.c.l.b16 %v218
    %v287 = vunpack.c.l.b16 %v219
    %v288 = vunpack.c.l.b16 %v220
    %v289 = vunpack.c.l.b16 %v221
    %v290 = vunpack.c.l.b16 %v222
    %v291 = vunpack.c.l.b16 %v223
    %v292 = vunpack.c.l.b16 %v224
    %v293 = vunpack.c.l.b16 %v225
    %v294 = vunpack.c.l.b16 %v226
    %v295 = vunpack.c.l.b16 %v227
    %v296 = vunpack.c.l.b16 %v228
    %v297 = vpack.c.b16 %v266, %v265
    %v298 = vpack.c.b16 %v268, %v267
    %v299 = vpack.c.b16 %v270, %v269
    %v300 = vpack.c.b16 %v272, %v271
    %v301 = vpack.c.b16 %v274, %v273
    %v302 = vpack.c.b16 %v276, %v275
    %v303 = vpack.c.b16 %v278, %v277
    %v304 = vpack.c.b16 %v280, %v279
    %v305 = vpack.c.b16 %v282, %v281
    %v306 = vpack.c.b16 %v284, %v283
    %v307 = vpack.c.b16 %v286, %v285
    %v308 = vpack.c.b16 %v288, %v287
    %v309 = vpack.c.b16 %v290, %v289
    %v310 = vpack.c.b16 %v292, %v291
    %v311 = vpack.c.b16 %v294, %v293
    %v312 = vpack.c.b16 %v296, %v295
    %329 = vmatpush.bf16.msra.mxu0 %v304
    %330 = vmatpush.bf16.msra.mxu0 %v303
    %331 = vmatpush.bf16.msra.mxu0 %v302
    %332 = vmatpush.bf16.msra.mxu0 %v301
    %333 = vmatpush.bf16.msra.mxu0 %v300
    %334 = vmatpush.bf16.msra.mxu0 %v299
    %335 = vmatpush.bf16.msra.mxu0 %v298
    %336 = vmatpush.bf16.msra.mxu0 %v297
    %337 = vmatmul.bf16.gmra.mxu0 %v195
    %v338 = vpop.f32.mrf.mxu0
    %v339 = vadd.f32 %v231, %v338
    %v340 = vpop.f32.mrf.mxu0
    %v341 = vadd.f32 %v231, %v340
    %342 = vdwg.mxu0
    %343 = vmatpush.bf16.msra.mxu0 %v312
    %344 = vmatpush.bf16.msra.mxu0 %v311
    %345 = vmatpush.bf16.msra.mxu0 %v310
    %346 = vmatpush.bf16.msra.mxu0 %v309
    %347 = vmatpush.bf16.msra.mxu0 %v308
    %348 = vmatpush.bf16.msra.mxu0 %v307
    %349 = vmatpush.bf16.msra.mxu0 %v306
    %350 = vmatpush.bf16.msra.mxu0 %v305
    %351 = vmatmul.bf16.gmra.mxu0 %v196
    %v352 = vpop.f32.mrf.mxu0
    %v353 = vadd.f32 %v339, %v352
    %v354 = vpop.f32.mrf.mxu0
    %v355 = vadd.f32 %v341, %v354
    %356 = vdwg.mxu0
    %v357 = vmax.f32 %v353, 0.0
    %v358 = vmax.f32 %v355, 0.0
    %v359 = vpack.c.bf16 %v358, %v357
    %v360 = vld [vmem:[#allocation10] sm:$0xf]
    %v361 = vld [vmem:[#allocation10 + $0x4] sm:$0xf]
    %v362 = vld [vmem:[#allocation10 + $0x8] sm:$0xf]
    %v363 = vld [vmem:[#allocation10 + $0xc] sm:$0xf]
    %v364 = vld [vmem:[#allocation10 + $0x10] sm:$0xf]
    %v365 = vld [vmem:[#allocation10 + $0x14] sm:$0xf]
    %v366 = vld [vmem:[#allocation10 + $0x18] sm:$0xf]
    %v367 = vld [vmem:[#allocation10 + $0x1c] sm:$0xf]
    %v368 = vld [vmem:[#allocation10 + $0x20] sm:$0xf]
    %v369 = vld [vmem:[#allocation10 + $0x24] sm:$0xf]
    %v370 = vld [vmem:[#allocation10 + $0x28] sm:$0xf]
    %v371 = vld [vmem:[#allocation10 + $0x2c] sm:$0xf]
    %v372 = vld [vmem:[#allocation10 + $0x30] sm:$0xf]
    %v373 = vld [vmem:[#allocation10 + $0x34] sm:$0xf]
    %v374 = vld [vmem:[#allocation10 + $0x38] sm:$0xf]
    %v375 = vld [vmem:[#allocation10 + $0x3c] sm:$0xf]
    %v376 = vld [vmem:[%s6] sm:$0x1]
    %v378 = vperm.slane %v376, 0
    %v396 = vunpack.c.l.b16 %v360
    %v397 = vunpack.c.l.b16 %v361
    %v398 = vunpack.c.l.b16 %v362
    %v399 = vunpack.c.l.b16 %v363
    %v400 = vunpack.c.l.b16 %v364
    %v401 = vunpack.c.l.b16 %v365
    %v402 = vunpack.c.l.b16 %v366
    %v403 = vunpack.c.l.b16 %v367
    %v404 = vunpack.c.l.b16 %v368
    %v405 = vunpack.c.l.b16 %v369
    %v406 = vunpack.c.l.b16 %v370
    %v407 = vunpack.c.l.b16 %v371
    %v408 = vunpack.c.l.b16 %v372
    %v409 = vunpack.c.l.b16 %v373
    %v410 = vunpack.c.l.b16 %v374
    %v411 = vunpack.c.l.b16 %v375
    %v412 = vpack.c.b16 %v397, %v396
    %v413 = vpack.c.b16 %v399, %v398
    %v414 = vpack.c.b16 %v401, %v400
    %v415 = vpack.c.b16 %v403, %v402
    %v416 = vpack.c.b16 %v405, %v404
    %v417 = vpack.c.b16 %v407, %v406
    %v418 = vpack.c.b16 %v409, %v408
    %v419 = vpack.c.b16 %v411, %v410
    %428 = vmatpush.bf16.msra.mxu0 %v419
    %429 = vmatpush.bf16.msra.mxu0 %v418
    %430 = vmatpush.bf16.msra.mxu0 %v417
    %431 = vmatpush.bf16.msra.mxu0 %v416
    %432 = vmatpush.bf16.msra.mxu0 %v415
    %433 = vmatpush.bf16.msra.mxu0 %v414
    %434 = vmatpush.bf16.msra.mxu0 %v413
    %435 = vmatpush.bf16.msra.mxu0 %v412
    %436 = vmatmul.bf16.gmra.mxu0 %v359
    %v437 = vpop.f32.mrf.mxu0
    %v438 = vadd.f32 %v378, %v437
    %v439 = vpop.f32.mrf.mxu0
    %v440 = vadd.f32 %v378, %v439
    %441 = vdwg.mxu0
    %v442 = vmax.f32 %v438, 0.0
    %v443 = vmax.f32 %v440, 0.0
    %v444 = vpack.c.bf16 %v443, %v442
    %v445 = vld [vmem:[#allocation11] sm:$0xf]
    %v446 = vld [vmem:[#allocation11 + $0x4] sm:$0xf]
    %v447 = vld [vmem:[#allocation11 + $0x8] sm:$0xf]
    %v448 = vld [vmem:[#allocation11 + $0xc] sm:$0xf]
    %v449 = vld [vmem:[#allocation11 + $0x10] sm:$0xf]
    %v450 = vld [vmem:[#allocation11 + $0x14] sm:$0xf]
    %v451 = vld [vmem:[#allocation11 + $0x18] sm:$0xf]
    %v452 = vld [vmem:[#allocation11 + $0x1c] sm:$0xf]
    %v453 = vld [vmem:[#allocation11 + $0x20] sm:$0xf]
    %v454 = vld [vmem:[#allocation11 + $0x24] sm:$0xf]
    %v455 = vld [vmem:[#allocation11 + $0x28] sm:$0xf]
    %v456 = vld [vmem:[#allocation11 + $0x2c] sm:$0xf]
    %v457 = vld [vmem:[#allocation11 + $0x30] sm:$0xf]
    %v458 = vld [vmem:[#allocation11 + $0x34] sm:$0xf]
    %v459 = vld [vmem:[#allocation11 + $0x38] sm:$0xf]
    %v460 = vld [vmem:[#allocation11 + $0x3c] sm:$0xf]
    %v461 = vld [vmem:[%s8] sm:$0x1]
    %v463 = vperm.slane %v461, 0
    %v481 = vunpack.c.l.b16 %v445
    %v482 = vunpack.c.l.b16 %v446
    %v483 = vunpack.c.l.b16 %v447
    %v484 = vunpack.c.l.b16 %v448
    %v485 = vunpack.c.l.b16 %v449
    %v486 = vunpack.c.l.b16 %v450
    %v487 = vunpack.c.l.b16 %v451
    %v488 = vunpack.c.l.b16 %v452
    %v489 = vunpack.c.l.b16 %v453
    %v490 = vunpack.c.l.b16 %v454
    %v491 = vunpack.c.l.b16 %v455
    %v492 = vunpack.c.l.b16 %v456
    %v493 = vunpack.c.l.b16 %v457
    %v494 = vunpack.c.l.b16 %v458
    %v495 = vunpack.c.l.b16 %v459
    %v496 = vunpack.c.l.b16 %v460
    %v497 = vpack.c.b16 %v482, %v481
    %v498 = vpack.c.b16 %v484, %v483
    %v499 = vpack.c.b16 %v486, %v485
    %v500 = vpack.c.b16 %v488, %v487
    %v501 = vpack.c.b16 %v490, %v489
    %v502 = vpack.c.b16 %v492, %v491
    %v503 = vpack.c.b16 %v494, %v493
    %v504 = vpack.c.b16 %v496, %v495
    %513 = vmatpush.bf16.msra.mxu0 %v504
    %514 = vmatpush.bf16.msra.mxu0 %v503
    %515 = vmatpush.bf16.msra.mxu0 %v502
    %516 = vmatpush.bf16.msra.mxu0 %v501
    %517 = vmatpush.bf16.msra.mxu0 %v500
    %518 = vmatpush.bf16.msra.mxu0 %v499
    %519 = vmatpush.bf16.msra.mxu0 %v498
    %520 = vmatpush.bf16.msra.mxu0 %v497
    %521 = vmatmul.bf16.gmra.mxu0 %v444
    %v522 = vpop.f32.mrf.mxu0
    %v523 = vadd.f32 %v463, %v522
    %v524 = vpop.f32.mrf.mxu0
    %v525 = vadd.f32 %v463, %v524
    %526 = vdwg.mxu0
    %v527 = vpack.c.bf16 %v523, %v523
    %v528 = vpack.c.bf16 %v525, %v525
    %529 = vst [vmem:[#allocation13] sm:$0xf] %v527
    %530 = vst [vmem:[#allocation13 + $0x4] sm:$0xf] %v528
    // Predicated region
    $region62: #{tpu_custom_call.1} parent=1 // pred_check
      _
    $region63: #{tpu_custom_call.1} parent=1 // pred_check_branch
      %532 = sbr.rel (0) target = $region65
    $region64: #{tpu_custom_call.1} parent=1 // pred_region
      %534 = vsyncadd [#allocation4], 0
      %s535 = sshll.u32 [#allocation13], 4
      %s536 = int_to_ptr.vmem [resolvable:$true] %s535
      %s537 = sshll.u32 %s9, 4
      %s538 = int_to_ptr.hbm [resolvable:$true] %s537
      %543 = dma.vmem_to_hbm [thread:$0]  %s536, 128, %s538, [#allocation4], 64, 64, 4
    $region65: #{tpu_custom_call.1} parent=1 // pred_fallthru
      _
    // Predicated region
    $region66: #{tpu_custom_call.1} parent=1 // pred_check
      _
    $region67: #{tpu_custom_call.1} parent=1 // pred_check_branch
      %545 = sbr.rel (0) target = $region69
    $region68: #{tpu_custom_call.1} parent=1 // pred_region
      %547 = dma.done [#allocation4], 128
    $region69: #{tpu_custom_call.1} parent=1 // pred_fallthru
      _
    %548 = vsyncpa [#allocation3], 1
    %549 = vsyncpa [#allocation6], 1
    %550 = vsyncpa [#allocation9], 1
    %551 = vsyncpa [#allocation12], 1
    %552 = vsyncpa [#allocation4], 1

</llo_original>
